<compile_context>
chip_gen: v6e
topology: v6e:2x2x1
jax: 0.10.0
libtpu: 0.0.40
codegen_flags: <defaults>
</compile_context>

<pallas_src>
import functools

import jax
import jax.numpy as jnp
from jax.experimental import pallas as pl
from jax.experimental.pallas import tpu as pltpu


def _round_up(n: int, m: int) -> int:
    return ((n + m - 1) // m) * m


# ------------------------------ Pallas kernel -------------------------------

def _fused_mlp_kernel(*refs, num_layers: int, n_classes: int):
    """Fused MLP: [matmul(+folded bias)+ReLU]* -> matmul -> log_softmax.

    refs = (x_ref, w0, w1, ..., w_{L-1}, o_ref).
    Biases are pre-folded into the weights (carrier-column trick), so each
    layer is one MXU matmul with fp32 accumulation; intermediates never leave
    the kernel.  Padded output lanes are masked before the log_softmax.
    """
    x_ref = refs[0]
    o_ref = refs[-1]
    w_refs = refs[1:-1]

    h = x_ref[...]

    # Hidden layers: single matmul (bias folded) + ReLU.
    for i in range(num_layers - 1):
        h = jnp.dot(h, w_refs[i][...], preferred_element_type=jnp.float32)
        h = jnp.maximum(h, 0.0)

    # Final layer (bias folded), then mask padded lanes and log_softmax.
    logits = jnp.dot(h, w_refs[-1][...], preferred_element_type=jnp.float32)
    col = jax.lax.broadcasted_iota(jnp.int32, logits.shape, 1)
    logits = jnp.where(col < n_classes, logits, jnp.finfo(jnp.float32).min)

    m = jnp.max(logits, axis=-1, keepdims=True)
    shifted = logits - m
    lse = jnp.log(jnp.sum(jnp.exp(shifted), axis=-1, keepdims=True))
    o_ref[...] = (shifted - lse).astype(o_ref.dtype)


# ------------------------------- FCN wrapper --------------------------------

def init_fcn_params(key, input_shape, output_shape, filters):
    """Synthetic init matching the nn.Linear shapes of the module.

    Weights stored as (in_features, out_features) (transposed vs. PyTorch's
    (out, in)); biases as (1, out_features).
    """
    input_features = 1
    for d in input_shape:
        input_features *= d
    dims = [input_features] + list(filters) + [output_shape]
    params = []
    for i in range(1, len(dims)):
        key, kw, kb = jax.random.split(key, 3)
        fan_in = dims[i - 1]
        bound = 1.0 / jnp.sqrt(fan_in)
        w = jax.random.uniform(kw, (dims[i - 1], dims[i]), jnp.float32, -bound, bound)
        b = jax.random.uniform(kb, (1, dims[i]), jnp.float32, -bound, bound)
        params.append((w, b))
    return params


def _fold_and_pad_params(params, input_features):
    """Fold biases into weights (carrier-column) and zero-pad widths to 128.

    Layout per layer i mapping a padded activation of width P_prev with a
    constant-1 column at index `carrier`:
      W'[0:f_prev, 0:f_out] = W        (original weights)
      W'[carrier,  0:f_out] = b        (bias row, picked up by the 1-column)
      W'[carrier,  f_out]   = 1        (hidden layers only: propagate carrier)
      everything else       = 0
    """
    x_pad_width = _round_up(input_features + 1, 128)
    prev_f = input_features
    carrier = input_features
    prev_pad = x_pad_width
    num_layers = len(params)
    folded = []
    out_pad = None
    for li, (w, b) in enumerate(params):
        f_out = w.shape[1]
        last = li == num_layers - 1
        cur_pad = _round_up(f_out if last else f_out + 1, 128)
        wf = jnp.zeros((prev_pad, cur_pad), jnp.float32)
        wf = wf.at[:prev_f, :f_out].set(w.astype(jnp.float32))
        wf = wf.at[carrier, :f_out].set(jnp.reshape(b, (-1,)).astype(jnp.float32))
        if not last:
            wf = wf.at[carrier, f_out].set(1.0)  # keep the ones column alive (ReLU(1)=1)
            prev_f, carrier, prev_pad = f_out, f_out, cur_pad
        else:
            out_pad = cur_pad
        folded.append(wf)
    return folded, x_pad_width, out_pad


def fcn_forward(x, params, input_shape):
    input_features = 1
    for d in input_shape:
        input_features *= d
    n_classes = params[-1][0].shape[1]
    num_layers = len(params)

    folded, x_pad_width, out_pad = _fold_and_pad_params(params, input_features)

    # Glue: flatten (B, C, H, W) -> (B, F), same ordering as torch .view
    h = x.reshape(-1, input_features).astype(jnp.float32)
    B = h.shape[0]

    # Batch tiling: sublane multiple of 8, tile TB <= 512 rows, grid over rows.
    B8 = _round_up(max(B, 1), 8)
    TB = min(B8, 512)
    B_pad = _round_up(B8, TB)

    h = jnp.pad(h, ((0, B_pad - B), (0, x_pad_width - input_features)))
    h = h.at[:, input_features].set(1.0)  # constant-1 carrier column for bias folding

    grid = (B_pad // TB,)
    in_specs = [pl.BlockSpec((TB, x_pad_width), lambda i: (i, 0))]
    # Weights: full-array blocks with constant index_map -> DMA'd once, resident.
    in_specs += [pl.BlockSpec(wf.shape, lambda i: (0, 0)) for wf in folded]
    out_specs = pl.BlockSpec((TB, out_pad), lambda i: (i, 0))

    flops = sum(2 * B_pad * wf.shape[0] * wf.shape[1] for wf in folded)
    bytes_accessed = 4 * (h.size + sum(wf.size for wf in folded) + B_pad * out_pad)
    cost = pl.CostEstimate(flops=flops,
                           transcendentals=B_pad * (out_pad + 1),
                           bytes_accessed=bytes_accessed)

    out = pl.pallas_call(
        functools.partial(_fused_mlp_kernel,
                          num_layers=num_layers, n_classes=n_classes),
        out_shape=jax.ShapeDtypeStruct((B_pad, out_pad), jnp.float32),
        grid=grid,
        in_specs=in_specs,
        out_specs=out_specs,
        compiler_params=pltpu.CompilerParams(
            dimension_semantics=("parallel",)),
        cost_estimate=cost,
    )(h, *folded)

    return out[:B, :n_classes]


# ----------------------------------- main ------------------------------------

if __name__ == "__main__":
    key = jax.random.PRNGKey(0)

    input_shape = (4, 16, 16)      # per-sample (C, H, W) -> 1024 features
    output_shape = 10              # number of classes
    network_config = {"filters": [32, 32]}
    batch = 2

    key, kx, kp = jax.random.split(key, 3)
    x = jax.random.normal(kx, (batch,) + input_shape, dtype=jnp.float32)
    params = init_fcn_params(kp, input_shape, output_shape, network_config["filters"])

    out = fcn_forward(x, params, input_shape)
    out = jax.block_until_ready(out)

    # Pure-JAX reference for correctness.
    h_ref = x.reshape(batch, -1)
    for (w, b) in params[:-1]:
        h_ref = jnp.maximum(h_ref @ w + b, 0.0)
    logits_ref = h_ref @ params[-1][0] + params[-1][1]
    ref = jax.nn.log_softmax(logits_ref, axis=-1)

    assert out.shape == (batch, output_shape)
    assert jnp.allclose(out, ref, atol=1e-4, rtol=1e-4)
    row_sums = jnp.sum(jnp.exp(out), axis=1)
    assert jnp.allclose(row_sums, jnp.ones_like(row_sums), atol=1e-4)

    print("KERNEL_OK")
</pallas_src>

<mosaic_0001>
module attributes {stable_mosaic.version = 11 : i64} {
  func.func @_fused_mlp_kernel(%arg0: i32, %arg1: memref<8x1152xf32, #tpu.memory_space<vmem>>, %arg2: memref<1152x128xf32, #tpu.memory_space<vmem>>, %arg3: memref<128x128xf32, #tpu.memory_space<vmem>>, %arg4: memref<128x128xf32, #tpu.memory_space<vmem>>, %arg5: memref<8x128xf32, #tpu.memory_space<vmem>>) attributes {dimension_semantics = [#tpu.dimension_semantics<parallel>], iteration_bounds = array<i64: 1>, scalar_prefetch = 0 : i64, scratch_operands = 0 : i64, tpu.core_type = #tpu.core_type<tc>, window_params = [{transform_indices = @transform_0, window_bounds = array<i64: 8, 1152>}, {pipeline_mode = #tpu.pipeline_mode<synchronous>, transform_indices = @transform_1, window_bounds = array<i64: 1152, 128>}, {pipeline_mode = #tpu.pipeline_mode<synchronous>, transform_indices = @transform_2, window_bounds = array<i64: 128, 128>}, {pipeline_mode = #tpu.pipeline_mode<synchronous>, transform_indices = @transform_3, window_bounds = array<i64: 128, 128>}, {transform_indices = @transform_4, window_bounds = array<i64: 8, 128>}]} {
    %c0 = arith.constant 0 : index
    %c0_0 = arith.constant 0 : index
    %0 = vector.load %arg1[%c0, %c0_0] : memref<8x1152xf32, #tpu.memory_space<vmem>>, vector<8x1152xf32>
    %c0_1 = arith.constant 0 : index
    %c0_2 = arith.constant 0 : index
    %1 = vector.load %arg2[%c0_1, %c0_2] : memref<1152x128xf32, #tpu.memory_space<vmem>>, vector<1152x128xf32>
    %cst = arith.constant dense<0.000000e+00> : vector<8x128xf32>
    %2 = tpu.matmul %0, %1, %cst {dimension_numbers = #tpu.dot_dimension_numbers<[1], [0], [0], [1], [0, 0, 1, 1], [], []>} : vector<8x1152xf32>, vector<1152x128xf32>, vector<8x128xf32> -> vector<8x128xf32>
    %cst_3 = arith.constant 0.000000e+00 : f32
    %3 = vector.broadcast %cst_3 : f32 to vector<8x128xf32>
    %4 = arith.maximumf %2, %3 : vector<8x128xf32>
    %c0_4 = arith.constant 0 : index
    %c0_5 = arith.constant 0 : index
    %5 = vector.load %arg3[%c0_4, %c0_5] : memref<128x128xf32, #tpu.memory_space<vmem>>, vector<128x128xf32>
    %cst_6 = arith.constant dense<0.000000e+00> : vector<8x128xf32>
    %6 = tpu.matmul %4, %5, %cst_6 {dimension_numbers = #tpu.dot_dimension_numbers<[1], [0], [0], [1], [0, 0, 1, 1], [], []>} : vector<8x128xf32>, vector<128x128xf32>, vector<8x128xf32> -> vector<8x128xf32>
    %cst_7 = arith.constant 0.000000e+00 : f32
    %7 = vector.broadcast %cst_7 : f32 to vector<8x128xf32>
    %8 = arith.maximumf %6, %7 : vector<8x128xf32>
    %c0_8 = arith.constant 0 : index
    %c0_9 = arith.constant 0 : index
    %9 = vector.load %arg4[%c0_8, %c0_9] : memref<128x128xf32, #tpu.memory_space<vmem>>, vector<128x128xf32>
    %cst_10 = arith.constant dense<0.000000e+00> : vector<8x128xf32>
    %10 = tpu.matmul %8, %9, %cst_10 {dimension_numbers = #tpu.dot_dimension_numbers<[1], [0], [0], [1], [0, 0, 1, 1], [], []>} : vector<8x128xf32>, vector<128x128xf32>, vector<8x128xf32> -> vector<8x128xf32>
    %11 = tpu.iota {dimensions = array<i32: 1>} : vector<8x128xi32>
    %c10_i32 = arith.constant 10 : i32
    %12 = vector.broadcast %c10_i32 : i32 to vector<8x128xi32>
    %13 = arith.cmpi slt, %11, %12 : vector<8x128xi32>
    %cst_11 = arith.constant -3.40282347E+38 : f32
    %14 = vector.broadcast %cst_11 : f32 to vector<8x128xf32>
    %15 = arith.select %13, %10, %14 : vector<8x128xi1>, vector<8x128xf32>
    %cst_12 = arith.constant dense<0xFF800000> : vector<8xf32>
    %16 = vector.multi_reduction <maximumf>, %15, %cst_12 [1] : vector<8x128xf32> to vector<8xf32>
    %17 = vector.shape_cast %16 : vector<8xf32> to vector<8x1xf32>
    %18 = vector.broadcast %17 : vector<8x1xf32> to vector<8x128xf32>
    %19 = arith.subf %15, %18 : vector<8x128xf32>
    %20 = math.exp %19 : vector<8x128xf32>
    %cst_13 = arith.constant dense<0.000000e+00> : vector<8xf32>
    %21 = vector.multi_reduction <add>, %20, %cst_13 [1] : vector<8x128xf32> to vector<8xf32>
    %22 = vector.shape_cast %21 : vector<8xf32> to vector<8x1xf32>
    %23 = math.log %22 : vector<8x1xf32>
    %24 = vector.broadcast %23 : vector<8x1xf32> to vector<8x128xf32>
    %25 = arith.subf %19, %24 : vector<8x128xf32>
    %c0_14 = arith.constant 0 : index
    %c0_15 = arith.constant 0 : index
    %26 = vector.load %arg5[%c0_14, %c0_15] : memref<8x128xf32, #tpu.memory_space<vmem>>, vector<8x128xf32>
    tpu.vector_store %arg5[%c0_14, %c0_15], %25 {strides = array<i32>} : memref<8x128xf32, #tpu.memory_space<vmem>>, vector<8x128xf32>,
    return
  }
  func.func @transform_0(%arg0: i32) -> (i32, i32) {
    %c0_i32 = arith.constant 0 : i32
    %c0_i32_0 = arith.constant 0 : i32
    return %arg0, %c0_i32 : i32, i32
  }
  func.func @transform_1(%arg0: i32) -> (i32, i32) {
    %c0_i32 = arith.constant 0 : i32
    %c0_i32_0 = arith.constant 0 : i32
    %c0_i32_1 = arith.constant 0 : i32
    return %c0_i32, %c0_i32_0 : i32, i32
  }
  func.func @transform_2(%arg0: i32) -> (i32, i32) {
    %c0_i32 = arith.constant 0 : i32
    %c0_i32_0 = arith.constant 0 : i32
    %c0_i32_1 = arith.constant 0 : i32
    return %c0_i32, %c0_i32_0 : i32, i32
  }
  func.func @transform_3(%arg0: i32) -> (i32, i32) {
    %c0_i32 = arith.constant 0 : i32
    %c0_i32_0 = arith.constant 0 : i32
    %c0_i32_1 = arith.constant 0 : i32
    return %c0_i32, %c0_i32_0 : i32, i32
  }
  func.func @transform_4(%arg0: i32) -> (i32, i32) {
    %c0_i32 = arith.constant 0 : i32
    %c0_i32_0 = arith.constant 0 : i32
    return %arg0, %c0_i32 : i32, i32
  }
}

</mosaic_0001>

<llo_original>
// kernel: tpu_custom_call.1
$region0: #{tpu_custom_call.1}
  #allocation0 [shape = 'u32[]', space=smem, size = 0x4, offset = 0x4, fixed_abs, tag = 'smem constant byte address 0x4 - core index']
  #allocation1 [shape = 'u32[144,128]{1,0:T(1,128)}', space=vmem, size = 0x12000, scoped, tag = 'internal scratch']
  %s0 = inlined_call_operand.hbm [shape: f32[8,1152], index: 0, kind: input, shape index: {}]
  %s1 = inlined_call_operand.hbm [shape: f32[1152,128], index: 1, kind: input, shape index: {}]
  %s2 = inlined_call_operand.hbm [shape: f32[128,128], index: 2, kind: input, shape index: {}]
  %s3 = inlined_call_operand.hbm [shape: f32[128,128], index: 3, kind: input, shape index: {}]
  %s4 = inlined_call_operand.hbm [shape: f32[8,128], index: 4, kind: output, shape index: {}]
  %s5 = sld [smem:[#allocation0]]
  $region42: #{tpu_custom_call.1} parent=0
    _
  %s7 = ssub.s32 1, %s5
  %s8 = scalar_select 0, %s7, %s5
  $region1: #{tpu_custom_call.1} parent=0
    #allocation2 [shape = 'u8[36864]{0}', space=vmem, size = 0x9000, scoped, tag = 'input window, operand 0, single buffered']
    #allocation3 [shape = 's32[1]{0}', space=sflag, size = 0x4, scoped, tag = 'scoped memory for tpu_custom_call.1']
    #allocation4 [shape = 's32[1]{0}', space=sflag, size = 0x4, scoped, tag = 'scoped memory for tpu_custom_call.1']
    #allocation5 [shape = 'u8[589824]{0}', space=vmem, size = 0x90000, scoped, tag = 'input window, operand 1, single buffered']
    #allocation6 [shape = 's32[1]{0}', space=sflag, size = 0x4, scoped, tag = 'scoped memory for tpu_custom_call.1']
    #allocation7 [shape = 'u8[65536]{0}', space=vmem, size = 0x10000, scoped, tag = 'input window, operand 2, single buffered']
    #allocation8 [shape = 'u8[65536]{0}', space=vmem, size = 0x10000, scoped, tag = 'input window, operand 3, single buffered']
    #allocation9 [shape = 's32[1]{0}', space=sflag, size = 0x4, scoped, tag = 'scoped memory for tpu_custom_call.1']
    #allocation10 [shape = 'u8[4096]{0}', space=vmem, size = 0x1000, scoped, tag = 'output window, operand 0, single buffered']
    %9 = vsyncpa [#allocation3], 0
    %10 = vsyncpa [#allocation6], 0
    %11 = vsyncpa [#allocation9], 0
    %12 = vsyncpa [#allocation4], 0
    // Predicated region
    $region2: #{tpu_custom_call.1} parent=1 // pred_check
      _
    $region3: #{tpu_custom_call.1} parent=1 // pred_check_branch
      %14 = sbr.rel (0) target = $region5
    $region4: #{tpu_custom_call.1} parent=1 // pred_region
      %s16 = ssub.s32 1152, 1152
      %17 = vsyncadd [#allocation3], %s16
      %s19 = sshll.u32 [#allocation2], 4
      %s20 = int_to_ptr.vmem [resolvable:$true] %s19
      %22 = dma.hbm_to_vmem [thread:$0]  %s0, 1152, %s20, [#allocation3]
    $region5: #{tpu_custom_call.1} parent=1 // pred_fallthru
      _
    // Predicated region
    $region6: #{tpu_custom_call.1} parent=1 // pred_check
      _
    $region7: #{tpu_custom_call.1} parent=1 // pred_check_branch
      %24 = sbr.rel (0) target = $region9
    $region8: #{tpu_custom_call.1} parent=1 // pred_region
      %s26 = ssub.s32 18432, 18432
      %27 = vsyncadd [#allocation6], %s26
      %s28 = sshll.u32 [#allocation5], 4
      %s29 = int_to_ptr.vmem [resolvable:$true] %s28
      %34 = dma.hbm_to_vmem [thread:$0]  %s1, 18432, %s29, [#allocation6], 128, 128, 8
    $region9: #{tpu_custom_call.1} parent=1 // pred_fallthru
      _
    // Predicated region
    $region10: #{tpu_custom_call.1} parent=1 // pred_check
      _
    $region11: #{tpu_custom_call.1} parent=1 // pred_check_branch
      %36 = sbr.rel (0) target = $region13
    $region12: #{tpu_custom_call.1} parent=1 // pred_region
      %s38 = ssub.s32 2048, 2048
      %39 = vsyncadd [#allocation6], %s38
      %s40 = sshll.u32 [#allocation7], 4
      %s41 = int_to_ptr.vmem [resolvable:$true] %s40
      %46 = dma.hbm_to_vmem [thread:$0]  %s2, 2048, %s41, [#allocation6], 128, 128, 8
    $region13: #{tpu_custom_call.1} parent=1 // pred_fallthru
      _
    // Predicated region
    $region14: #{tpu_custom_call.1} parent=1 // pred_check
      _
    $region15: #{tpu_custom_call.1} parent=1 // pred_check_branch
      %48 = sbr.rel (0) target = $region17
    $region16: #{tpu_custom_call.1} parent=1 // pred_region
      %s50 = ssub.s32 2048, 2048
      %51 = vsyncadd [#allocation9], %s50
      %s52 = sshll.u32 [#allocation8], 4
      %s53 = int_to_ptr.vmem [resolvable:$true] %s52
      %58 = dma.hbm_to_vmem [thread:$0]  %s3, 2048, %s53, [#allocation9], 128, 128, 8
    $region17: #{tpu_custom_call.1} parent=1 // pred_fallthru
      _
    // Predicated region
    $region18: #{tpu_custom_call.1} parent=1 // pred_check
      _
    $region19: #{tpu_custom_call.1} parent=1 // pred_check_branch
      %60 = sbr.rel (0) target = $region21
    $region20: #{tpu_custom_call.1} parent=1 // pred_region
      %61 = dma.done [#allocation3], 1152
    $region21: #{tpu_custom_call.1} parent=1 // pred_fallthru
      _
    // Predicated region
    $region22: #{tpu_custom_call.1} parent=1 // pred_check
      _
    $region23: #{tpu_custom_call.1} parent=1 // pred_check_branch
      %63 = sbr.rel (0) target = $region25
    $region24: #{tpu_custom_call.1} parent=1 // pred_region
      %64 = dma.done [#allocation6], 18432
    $region25: #{tpu_custom_call.1} parent=1 // pred_fallthru
      _
    // Predicated region
    $region26: #{tpu_custom_call.1} parent=1 // pred_check
      _
    $region27: #{tpu_custom_call.1} parent=1 // pred_check_branch
      %66 = sbr.rel (0) target = $region29
    $region28: #{tpu_custom_call.1} parent=1 // pred_region
      %67 = dma.done [#allocation6], 2048
    $region29: #{tpu_custom_call.1} parent=1 // pred_fallthru
      _
    // Predicated region
    $region30: #{tpu_custom_call.1} parent=1 // pred_check
      _
    $region31: #{tpu_custom_call.1} parent=1 // pred_check_branch
      %69 = sbr.rel (0) target = $region33
    $region32: #{tpu_custom_call.1} parent=1 // pred_region
      %70 = dma.done [#allocation9], 2048
    $region33: #{tpu_custom_call.1} parent=1 // pred_fallthru
      _
    %v71 = vld [vmem:[#allocation2] sm:$0xff]
    %v72 = vld [vmem:[#allocation2 + $0x8] sm:$0xff]
    %v73 = vld [vmem:[#allocation2 + $0x10] sm:$0xff]
    %v74 = vld [vmem:[#allocation2 + $0x18] sm:$0xff]
    %v75 = vld [vmem:[#allocation2 + $0x20] sm:$0xff]
    %v76 = vld [vmem:[#allocation2 + $0x28] sm:$0xff]
    %v77 = vld [vmem:[#allocation2 + $0x30] sm:$0xff]
    %v78 = vld [vmem:[#allocation2 + $0x38] sm:$0xff]
    %v79 = vld [vmem:[#allocation2 + $0x40] sm:$0xff]
    %v80 = vld [vmem:[#allocation5] sm:$0xff]
    %v81 = vld [vmem:[#allocation5 + $0x8] sm:$0xff]
    %v82 = vld [vmem:[#allocation5 + $0x10] sm:$0xff]
    %v83 = vld [vmem:[#allocation5 + $0x18] sm:$0xff]
    %v84 = vld [vmem:[#allocation5 + $0x20] sm:$0xff]
    %v85 = vld [vmem:[#allocation5 + $0x28] sm:$0xff]
    %v86 = vld [vmem:[#allocation5 + $0x30] sm:$0xff]
    %v87 = vld [vmem:[#allocation5 + $0x38] sm:$0xff]
    %v88 = vld [vmem:[#allocation5 + $0x40] sm:$0xff]
    %v89 = vld [vmem:[#allocation5 + $0x48] sm:$0xff]
    %v90 = vld [vmem:[#allocation5 + $0x50] sm:$0xff]
    %v91 = vld [vmem:[#allocation5 + $0x58] sm:$0xff]
    %v92 = vld [vmem:[#allocation5 + $0x60] sm:$0xff]
    %v93 = vld [vmem:[#allocation5 + $0x68] sm:$0xff]
    %v94 = vld [vmem:[#allocation5 + $0x70] sm:$0xff]
    %v95 = vld [vmem:[#allocation5 + $0x78] sm:$0xff]
    %v96 = vld [vmem:[#allocation5 + $0x80] sm:$0xff]
    %v97 = vld [vmem:[#allocation5 + $0x88] sm:$0xff]
    %v98 = vld [vmem:[#allocation5 + $0x90] sm:$0xff]
    %v99 = vld [vmem:[#allocation5 + $0x98] sm:$0xff]
    %v100 = vld [vmem:[#allocation5 + $0xa0] sm:$0xff]
    %v101 = vld [vmem:[#allocation5 + $0xa8] sm:$0xff]
    %v102 = vld [vmem:[#allocation5 + $0xb0] sm:$0xff]
    %v103 = vld [vmem:[#allocation5 + $0xb8] sm:$0xff]
    %v104 = vld [vmem:[#allocation5 + $0xc0] sm:$0xff]
    %v105 = vld [vmem:[#allocation5 + $0xc8] sm:$0xff]
    %v106 = vld [vmem:[#allocation5 + $0xd0] sm:$0xff]
    %v107 = vld [vmem:[#allocation5 + $0xd8] sm:$0xff]
    %v108 = vld [vmem:[#allocation5 + $0xe0] sm:$0xff]
    %v109 = vld [vmem:[#allocation5 + $0xe8] sm:$0xff]
    %v110 = vld [vmem:[#allocation5 + $0xf0] sm:$0xff]
    %v111 = vld [vmem:[#allocation5 + $0xf8] sm:$0xff]
    %v112 = vld [vmem:[#allocation5 + $0x100] sm:$0xff]
    %v113 = vld [vmem:[#allocation5 + $0x108] sm:$0xff]
    %v114 = vld [vmem:[#allocation5 + $0x110] sm:$0xff]
    %v115 = vld [vmem:[#allocation5 + $0x118] sm:$0xff]
    %v116 = vld [vmem:[#allocation5 + $0x120] sm:$0xff]
    %v117 = vld [vmem:[#allocation5 + $0x128] sm:$0xff]
    %v118 = vld [vmem:[#allocation5 + $0x130] sm:$0xff]
    %v119 = vld [vmem:[#allocation5 + $0x138] sm:$0xff]
    %v120 = vld [vmem:[#allocation5 + $0x140] sm:$0xff]
    %v121 = vld [vmem:[#allocation5 + $0x148] sm:$0xff]
    %v122 = vld [vmem:[#allocation5 + $0x150] sm:$0xff]
    %v123 = vld [vmem:[#allocation5 + $0x158] sm:$0xff]
    %v124 = vld [vmem:[#allocation5 + $0x160] sm:$0xff]
    %v125 = vld [vmem:[#allocation5 + $0x168] sm:$0xff]
    %v126 = vld [vmem:[#allocation5 + $0x170] sm:$0xff]
    %v127 = vld [vmem:[#allocation5 + $0x178] sm:$0xff]
    %v128 = vld [vmem:[#allocation5 + $0x180] sm:$0xff]
    %v129 = vld [vmem:[#allocation5 + $0x188] sm:$0xff]
    %v130 = vld [vmem:[#allocation5 + $0x190] sm:$0xff]
    %v131 = vld [vmem:[#allocation5 + $0x198] sm:$0xff]
    %v132 = vld [vmem:[#allocation5 + $0x1a0] sm:$0xff]
    %v133 = vld [vmem:[#allocation5 + $0x1a8] sm:$0xff]
    %v134 = vld [vmem:[#allocation5 + $0x1b0] sm:$0xff]
    %v135 = vld [vmem:[#allocation5 + $0x1b8] sm:$0xff]
    %v136 = vld [vmem:[#allocation5 + $0x1c0] sm:$0xff]
    %v137 = vld [vmem:[#allocation5 + $0x1c8] sm:$0xff]
    %v138 = vld [vmem:[#allocation5 + $0x1d0] sm:$0xff]
    %v139 = vld [vmem:[#allocation5 + $0x1d8] sm:$0xff]
    %v140 = vld [vmem:[#allocation5 + $0x1e0] sm:$0xff]
    %v141 = vld [vmem:[#allocation5 + $0x1e8] sm:$0xff]
    %v142 = vld [vmem:[#allocation5 + $0x1f0] sm:$0xff]
    %v143 = vld [vmem:[#allocation5 + $0x1f8] sm:$0xff]
    %v144 = vld [vmem:[#allocation5 + $0x200] sm:$0xff]
    %v145 = vld [vmem:[#allocation5 + $0x208] sm:$0xff]
    %v146 = vld [vmem:[#allocation5 + $0x210] sm:$0xff]
    %v147 = vld [vmem:[#allocation5 + $0x218] sm:$0xff]
    %v148 = vld [vmem:[#allocation5 + $0x220] sm:$0xff]
    %v149 = vld [vmem:[#allocation5 + $0x228] sm:$0xff]
    %v150 = vld [vmem:[#allocation5 + $0x230] sm:$0xff]
    %v151 = vld [vmem:[#allocation5 + $0x238] sm:$0xff]
    %v152 = vld [vmem:[#allocation5 + $0x240] sm:$0xff]
    %v153 = vld [vmem:[#allocation5 + $0x248] sm:$0xff]
    %v154 = vld [vmem:[#allocation5 + $0x250] sm:$0xff]
    %v155 = vld [vmem:[#allocation5 + $0x258] sm:$0xff]
    %v156 = vld [vmem:[#allocation5 + $0x260] sm:$0xff]
    %v157 = vld [vmem:[#allocation5 + $0x268] sm:$0xff]
    %v158 = vld [vmem:[#allocation5 + $0x270] sm:$0xff]
    %v159 = vld [vmem:[#allocation5 + $0x278] sm:$0xff]
    %v160 = vld [vmem:[#allocation5 + $0x280] sm:$0xff]
    %v161 = vld [vmem:[#allocation5 + $0x288] sm:$0xff]
    %v162 = vld [vmem:[#allocation5 + $0x290] sm:$0xff]
    %v163 = vld [vmem:[#allocation5 + $0x298] sm:$0xff]
    %v164 = vld [vmem:[#allocation5 + $0x2a0] sm:$0xff]
    %v165 = vld [vmem:[#allocation5 + $0x2a8] sm:$0xff]
    %v166 = vld [vmem:[#allocation5 + $0x2b0] sm:$0xff]
    %v167 = vld [vmem:[#allocation5 + $0x2b8] sm:$0xff]
    %v168 = vld [vmem:[#allocation5 + $0x2c0] sm:$0xff]
    %v169 = vld [vmem:[#allocation5 + $0x2c8] sm:$0xff]
    %v170 = vld [vmem:[#allocation5 + $0x2d0] sm:$0xff]
    %v171 = vld [vmem:[#allocation5 + $0x2d8] sm:$0xff]
    %v172 = vld [vmem:[#allocation5 + $0x2e0] sm:$0xff]
    %v173 = vld [vmem:[#allocation5 + $0x2e8] sm:$0xff]
    %v174 = vld [vmem:[#allocation5 + $0x2f0] sm:$0xff]
    %v175 = vld [vmem:[#allocation5 + $0x2f8] sm:$0xff]
    %v176 = vld [vmem:[#allocation5 + $0x300] sm:$0xff]
    %v177 = vld [vmem:[#allocation5 + $0x308] sm:$0xff]
    %v178 = vld [vmem:[#allocation5 + $0x310] sm:$0xff]
    %v179 = vld [vmem:[#allocation5 + $0x318] sm:$0xff]
    %v180 = vld [vmem:[#allocation5 + $0x320] sm:$0xff]
    %v181 = vld [vmem:[#allocation5 + $0x328] sm:$0xff]
    %v182 = vld [vmem:[#allocation5 + $0x330] sm:$0xff]
    %v183 = vld [vmem:[#allocation5 + $0x338] sm:$0xff]
    %v184 = vld [vmem:[#allocation5 + $0x340] sm:$0xff]
    %v185 = vld [vmem:[#allocation5 + $0x348] sm:$0xff]
    %v186 = vld [vmem:[#allocation5 + $0x350] sm:$0xff]
    %v187 = vld [vmem:[#allocation5 + $0x358] sm:$0xff]
    %v188 = vld [vmem:[#allocation5 + $0x360] sm:$0xff]
    %v189 = vld [vmem:[#allocation5 + $0x368] sm:$0xff]
    %v190 = vld [vmem:[#allocation5 + $0x370] sm:$0xff]
    %v191 = vld [vmem:[#allocation5 + $0x378] sm:$0xff]
    %v192 = vld [vmem:[#allocation5 + $0x380] sm:$0xff]
    %v193 = vld [vmem:[#allocation5 + $0x388] sm:$0xff]
    %v194 = vld [vmem:[#allocation5 + $0x390] sm:$0xff]
    %v195 = vld [vmem:[#allocation5 + $0x398] sm:$0xff]
    %v196 = vld [vmem:[#allocation5 + $0x3a0] sm:$0xff]
    %v197 = vld [vmem:[#allocation5 + $0x3a8] sm:$0xff]
    %v198 = vld [vmem:[#allocation5 + $0x3b0] sm:$0xff]
    %v199 = vld [vmem:[#allocation5 + $0x3b8] sm:$0xff]
    %v200 = vld [vmem:[#allocation5 + $0x3c0] sm:$0xff]
    %v201 = vld [vmem:[#allocation5 + $0x3c8] sm:$0xff]
    %v202 = vld [vmem:[#allocation5 + $0x3d0] sm:$0xff]
    %v203 = vld [vmem:[#allocation5 + $0x3d8] sm:$0xff]
    %v204 = vld [vmem:[#allocation5 + $0x3e0] sm:$0xff]
    %v205 = vld [vmem:[#allocation5 + $0x3e8] sm:$0xff]
    %v206 = vld [vmem:[#allocation5 + $0x3f0] sm:$0xff]
    %v207 = vld [vmem:[#allocation5 + $0x3f8] sm:$0xff]
    %v208 = vld [vmem:[#allocation5 + $0x400] sm:$0xff]
    %v209 = vld [vmem:[#allocation5 + $0x408] sm:$0xff]
    %v210 = vld [vmem:[#allocation5 + $0x410] sm:$0xff]
    %v211 = vld [vmem:[#allocation5 + $0x418] sm:$0xff]
    %v212 = vld [vmem:[#allocation5 + $0x420] sm:$0xff]
    %v213 = vld [vmem:[#allocation5 + $0x428] sm:$0xff]
    %v214 = vld [vmem:[#allocation5 + $0x430] sm:$0xff]
    %v215 = vld [vmem:[#allocation5 + $0x438] sm:$0xff]
    %v216 = vld [vmem:[#allocation5 + $0x440] sm:$0xff]
    %v217 = vld [vmem:[#allocation5 + $0x448] sm:$0xff]
    %v218 = vld [vmem:[#allocation5 + $0x450] sm:$0xff]
    %v219 = vld [vmem:[#allocation5 + $0x458] sm:$0xff]
    %v220 = vld [vmem:[#allocation5 + $0x460] sm:$0xff]
    %v221 = vld [vmem:[#allocation5 + $0x468] sm:$0xff]
    %v222 = vld [vmem:[#allocation5 + $0x470] sm:$0xff]
    %v223 = vld [vmem:[#allocation5 + $0x478] sm:$0xff]
    %224 = vmatprep.subr.mxu0 0.0
    %225 = vmatpush1.msra.mxu0 %v95
    %226 = vmatprep.subr.mxu0 0.0
    %227 = vmatpush1.msra.mxu0 %v94
    %228 = vmatprep.subr.mxu0 0.0
    %229 = vmatpush1.msra.mxu0 %v93
    %230 = vmatprep.subr.mxu0 0.0
    %231 = vmatpush1.msra.mxu0 %v92
    %232 = vmatprep.subr.mxu0 0.0
    %233 = vmatpush1.msra.mxu0 %v91
    %234 = vmatprep.subr.mxu0 0.0
    %235 = vmatpush1.msra.mxu0 %v90
    %236 = vmatprep.subr.mxu0 0.0
    %237 = vmatpush1.msra.mxu0 %v89
    %238 = vmatprep.subr.mxu0 0.0
    %239 = vmatpush1.msra.mxu0 %v88
    %240 = vmatprep.subr.mxu0 0.0
    %241 = vmatpush1.msra.mxu0 %v87
    %242 = vmatprep.subr.mxu0 0.0
    %243 = vmatpush1.msra.mxu0 %v86
    %244 = vmatprep.subr.mxu0 0.0
    %245 = vmatpush1.msra.mxu0 %v85
    %246 = vmatprep.subr.mxu0 0.0
    %247 = vmatpush1.msra.mxu0 %v84
    %248 = vmatprep.subr.mxu0 0.0
    %249 = vmatpush1.msra.mxu0 %v83
    %250 = vmatprep.subr.mxu0 0.0
    %251 = vmatpush1.msra.mxu0 %v82
    %252 = vmatprep.subr.mxu0 0.0
    %253 = vmatpush1.msra.mxu0 %v81
    %254 = vmatprep.subr.mxu0 0.0
    %255 = vmatpush1.msra.mxu0 %v80
    %256 = vmatprep.subr.mxu0 0.0
    %257 = vmatpush2.msra.mxu0 %v111
    %258 = vmatprep.subr.mxu0 0.0
    %259 = vmatpush2.msra.mxu0 %v110
    %260 = vmatprep.subr.mxu0 0.0
    %261 = vmatpush2.msra.mxu0 %v109
    %262 = vmatprep.subr.mxu0 0.0
    %263 = vmatpush2.msra.mxu0 %v108
    %264 = vmatprep.subr.mxu0 0.0
    %265 = vmatpush2.msra.mxu0 %v107
    %266 = vmatprep.subr.mxu0 0.0
    %267 = vmatpush2.msra.mxu0 %v106
    %268 = vmatprep.subr.mxu0 0.0
    %269 = vmatpush2.msra.mxu0 %v105
    %270 = vmatprep.subr.mxu0 0.0
    %271 = vmatpush2.msra.mxu0 %v104
    %272 = vmatprep.subr.mxu0 0.0
    %273 = vmatpush2.msra.mxu0 %v103
    %274 = vmatprep.subr.mxu0 0.0
    %275 = vmatpush2.msra.mxu0 %v102
    %276 = vmatprep.subr.mxu0 0.0
    %277 = vmatpush2.msra.mxu0 %v101
    %278 = vmatprep.subr.mxu0 0.0
    %279 = vmatpush2.msra.mxu0 %v100
    %280 = vmatprep.subr.mxu0 0.0
    %281 = vmatpush2.msra.mxu0 %v99
    %282 = vmatprep.subr.mxu0 0.0
    %283 = vmatpush2.msra.mxu0 %v98
    %284 = vmatprep.subr.mxu0 0.0
    %285 = vmatpush2.msra.mxu0 %v97
    %286 = vmatprep.subr.mxu0 0.0
    %287 = vmatpush2.msra.mxu0 %v96
    %288 = vmatprep.mubr.f32.mxu0 %v72
    %289 = vmatmul.mubr.f32.gmra.mxu0 %v71
    %v290 = vpop.f32.mrf.mxu0
    %v291 = vadd.f32 0.0, %v290
    %v292 = vpop.f32.mrf.mxu0
    %293 = vdwg.mxu0
    %294 = vmatprep.subr.mxu0 0.0
    %295 = vmatpush1.msra.mxu0 %v127
    %296 = vmatprep.subr.mxu0 0.0
    %297 = vmatpush1.msra.mxu0 %v126
    %298 = vmatprep.subr.mxu0 0.0
    %299 = vmatpush1.msra.mxu0 %v125
    %300 = vmatprep.subr.mxu0 0.0
    %301 = vmatpush1.msra.mxu0 %v124
    %302 = vmatprep.subr.mxu0 0.0
    %303 = vmatpush1.msra.mxu0 %v123
    %304 = vmatprep.subr.mxu0 0.0
    %305 = vmatpush1.msra.mxu0 %v122
    %306 = vmatprep.subr.mxu0 0.0
    %307 = vmatpush1.msra.mxu0 %v121
    %308 = vmatprep.subr.mxu0 0.0
    %309 = vmatpush1.msra.mxu0 %v120
    %310 = vmatprep.subr.mxu0 0.0
    %311 = vmatpush1.msra.mxu0 %v119
    %312 = vmatprep.subr.mxu0 0.0
    %313 = vmatpush1.msra.mxu0 %v118
    %314 = vmatprep.subr.mxu0 0.0
    %315 = vmatpush1.msra.mxu0 %v117
    %316 = vmatprep.subr.mxu0 0.0
    %317 = vmatpush1.msra.mxu0 %v116
    %318 = vmatprep.subr.mxu0 0.0
    %319 = vmatpush1.msra.mxu0 %v115
    %320 = vmatprep.subr.mxu0 0.0
    %321 = vmatpush1.msra.mxu0 %v114
    %322 = vmatprep.subr.mxu0 0.0
    %323 = vmatpush1.msra.mxu0 %v113
    %324 = vmatprep.subr.mxu0 0.0
    %325 = vmatpush1.msra.mxu0 %v112
    %326 = vmatprep.subr.mxu0 0.0
    %327 = vmatpush2.msra.mxu0 %v143
    %328 = vmatprep.subr.mxu0 0.0
    %329 = vmatpush2.msra.mxu0 %v142
    %330 = vmatprep.subr.mxu0 0.0
    %331 = vmatpush2.msra.mxu0 %v141
    %332 = vmatprep.subr.mxu0 0.0
    %333 = vmatpush2.msra.mxu0 %v140
    %334 = vmatprep.subr.mxu0 0.0
    %335 = vmatpush2.msra.mxu0 %v139
    %336 = vmatprep.subr.mxu0 0.0
    %337 = vmatpush2.msra.mxu0 %v138
    %338 = vmatprep.subr.mxu0 0.0
    %339 = vmatpush2.msra.mxu0 %v137
    %340 = vmatprep.subr.mxu0 0.0
    %341 = vmatpush2.msra.mxu0 %v136
    %342 = vmatprep.subr.mxu0 0.0
    %343 = vmatpush2.msra.mxu0 %v135
    %344 = vmatprep.subr.mxu0 0.0
    %345 = vmatpush2.msra.mxu0 %v134
    %346 = vmatprep.subr.mxu0 0.0
    %347 = vmatpush2.msra.mxu0 %v133
    %348 = vmatprep.subr.mxu0 0.0
    %349 = vmatpush2.msra.mxu0 %v132
    %350 = vmatprep.subr.mxu0 0.0
    %351 = vmatpush2.msra.mxu0 %v131
    %352 = vmatprep.subr.mxu0 0.0
    %353 = vmatpush2.msra.mxu0 %v130
    %354 = vmatprep.subr.mxu0 0.0
    %355 = vmatpush2.msra.mxu0 %v129
    %356 = vmatprep.subr.mxu0 0.0
    %357 = vmatpush2.msra.mxu0 %v128
    %358 = vmatprep.mubr.f32.mxu0 %v74
    %359 = vmatmul.mubr.f32.gmra.mxu0 %v73
    %v360 = vpop.f32.mrf.mxu0
    %v361 = vadd.f32 %v291, %v360
    %v362 = vpop.f32.mrf.mxu0
    %363 = vdwg.mxu0
    %364 = vmatprep.subr.mxu0 0.0
    %365 = vmatpush1.msra.mxu0 %v159
    %366 = vmatprep.subr.mxu0 0.0
    %367 = vmatpush1.msra.mxu0 %v158
    %368 = vmatprep.subr.mxu0 0.0
    %369 = vmatpush1.msra.mxu0 %v157
    %370 = vmatprep.subr.mxu0 0.0
    %371 = vmatpush1.msra.mxu0 %v156
    %372 = vmatprep.subr.mxu0 0.0
    %373 = vmatpush1.msra.mxu0 %v155
    %374 = vmatprep.subr.mxu0 0.0
    %375 = vmatpush1.msra.mxu0 %v154
    %376 = vmatprep.subr.mxu0 0.0
    %377 = vmatpush1.msra.mxu0 %v153
    %378 = vmatprep.subr.mxu0 0.0
    %379 = vmatpush1.msra.mxu0 %v152
    %380 = vmatprep.subr.mxu0 0.0
    %381 = vmatpush1.msra.mxu0 %v151
    %382 = vmatprep.subr.mxu0 0.0
    %383 = vmatpush1.msra.mxu0 %v150
    %384 = vmatprep.subr.mxu0 0.0
    %385 = vmatpush1.msra.mxu0 %v149
    %386 = vmatprep.subr.mxu0 0.0
    %387 = vmatpush1.msra.mxu0 %v148
    %388 = vmatprep.subr.mxu0 0.0
    %389 = vmatpush1.msra.mxu0 %v147
    %390 = vmatprep.subr.mxu0 0.0
    %391 = vmatpush1.msra.mxu0 %v146
    %392 = vmatprep.subr.mxu0 0.0
    %393 = vmatpush1.msra.mxu0 %v145
    %394 = vmatprep.subr.mxu0 0.0
    %395 = vmatpush1.msra.mxu0 %v144
    %396 = vmatprep.subr.mxu0 0.0
    %397 = vmatpush2.msra.mxu0 %v175
    %398 = vmatprep.subr.mxu0 0.0
    %399 = vmatpush2.msra.mxu0 %v174
    %400 = vmatprep.subr.mxu0 0.0
    %401 = vmatpush2.msra.mxu0 %v173
    %402 = vmatprep.subr.mxu0 0.0
    %403 = vmatpush2.msra.mxu0 %v172
    %404 = vmatprep.subr.mxu0 0.0
    %405 = vmatpush2.msra.mxu0 %v171
    %406 = vmatprep.subr.mxu0 0.0
    %407 = vmatpush2.msra.mxu0 %v170
    %408 = vmatprep.subr.mxu0 0.0
    %409 = vmatpush2.msra.mxu0 %v169
    %410 = vmatprep.subr.mxu0 0.0
    %411 = vmatpush2.msra.mxu0 %v168
    %412 = vmatprep.subr.mxu0 0.0
    %413 = vmatpush2.msra.mxu0 %v167
    %414 = vmatprep.subr.mxu0 0.0
    %415 = vmatpush2.msra.mxu0 %v166
    %416 = vmatprep.subr.mxu0 0.0
    %417 = vmatpush2.msra.mxu0 %v165
    %418 = vmatprep.subr.mxu0 0.0
    %419 = vmatpush2.msra.mxu0 %v164
    %420 = vmatprep.subr.mxu0 0.0
    %421 = vmatpush2.msra.mxu0 %v163
    %422 = vmatprep.subr.mxu0 0.0
    %423 = vmatpush2.msra.mxu0 %v162
    %424 = vmatprep.subr.mxu0 0.0
    %425 = vmatpush2.msra.mxu0 %v161
    %426 = vmatprep.subr.mxu0 0.0
    %427 = vmatpush2.msra.mxu0 %v160
    %428 = vmatprep.mubr.f32.mxu0 %v76
    %429 = vmatmul.mubr.f32.gmra.mxu0 %v75
    %v430 = vpop.f32.mrf.mxu0
    %v431 = vadd.f32 %v361, %v430
    %v432 = vpop.f32.mrf.mxu0
    %433 = vdwg.mxu0
    %434 = vmatprep.subr.mxu0 0.0
    %435 = vmatpush1.msra.mxu0 %v191
    %436 = vmatprep.subr.mxu0 0.0
    %437 = vmatpush1.msra.mxu0 %v190
    %438 = vmatprep.subr.mxu0 0.0
    %439 = vmatpush1.msra.mxu0 %v189
    %440 = vmatprep.subr.mxu0 0.0
    %441 = vmatpush1.msra.mxu0 %v188
    %442 = vmatprep.subr.mxu0 0.0
    %443 = vmatpush1.msra.mxu0 %v187
    %444 = vmatprep.subr.mxu0 0.0
    %445 = vmatpush1.msra.mxu0 %v186
    %446 = vmatprep.subr.mxu0 0.0
    %447 = vmatpush1.msra.mxu0 %v185
    %448 = vmatprep.subr.mxu0 0.0
    %449 = vmatpush1.msra.mxu0 %v184
    %450 = vmatprep.subr.mxu0 0.0
    %451 = vmatpush1.msra.mxu0 %v183
    %452 = vmatprep.subr.mxu0 0.0
    %453 = vmatpush1.msra.mxu0 %v182
    %454 = vmatprep.subr.mxu0 0.0
    %455 = vmatpush1.msra.mxu0 %v181
    %456 = vmatprep.subr.mxu0 0.0
    %457 = vmatpush1.msra.mxu0 %v180
    %458 = vmatprep.subr.mxu0 0.0
    %459 = vmatpush1.msra.mxu0 %v179
    %460 = vmatprep.subr.mxu0 0.0
    %461 = vmatpush1.msra.mxu0 %v178
    %462 = vmatprep.subr.mxu0 0.0
    %463 = vmatpush1.msra.mxu0 %v177
    %464 = vmatprep.subr.mxu0 0.0
    %465 = vmatpush1.msra.mxu0 %v176
    %466 = vmatprep.subr.mxu0 0.0
    %467 = vmatpush2.msra.mxu0 %v207
    %468 = vmatprep.subr.mxu0 0.0
    %469 = vmatpush2.msra.mxu0 %v206
    %470 = vmatprep.subr.mxu0 0.0
    %471 = vmatpush2.msra.mxu0 %v205
    %472 = vmatprep.subr.mxu0 0.0
    %473 = vmatpush2.msra.mxu0 %v204
    %474 = vmatprep.subr.mxu0 0.0
    %475 = vmatpush2.msra.mxu0 %v203
    %476 = vmatprep.subr.mxu0 0.0
    %477 = vmatpush2.msra.mxu0 %v202
    %478 = vmatprep.subr.mxu0 0.0
    %479 = vmatpush2.msra.mxu0 %v201
    %480 = vmatprep.subr.mxu0 0.0
    %481 = vmatpush2.msra.mxu0 %v200
    %482 = vmatprep.subr.mxu0 0.0
    %483 = vmatpush2.msra.mxu0 %v199
    %484 = vmatprep.subr.mxu0 0.0
    %485 = vmatpush2.msra.mxu0 %v198
    %486 = vmatprep.subr.mxu0 0.0
    %487 = vmatpush2.msra.mxu0 %v197
    %488 = vmatprep.subr.mxu0 0.0
    %489 = vmatpush2.msra.mxu0 %v196
    %490 = vmatprep.subr.mxu0 0.0
    %491 = vmatpush2.msra.mxu0 %v195
    %492 = vmatprep.subr.mxu0 0.0
    %493 = vmatpush2.msra.mxu0 %v194
    %494 = vmatprep.subr.mxu0 0.0
    %495 = vmatpush2.msra.mxu0 %v193
    %496 = vmatprep.subr.mxu0 0.0
    %497 = vmatpush2.msra.mxu0 %v192
    %498 = vmatprep.mubr.f32.mxu0 %v78
    %499 = vmatmul.mubr.f32.gmra.mxu0 %v77
    %v500 = vpop.f32.mrf.mxu0
    %v501 = vadd.f32 %v431, %v500
    %v502 = vpop.f32.mrf.mxu0
    %503 = vdwg.mxu0
    %504 = vmatprep.subr.mxu0 0.0
    %505 = vmatpush1.msra.mxu0 %v223
    %506 = vmatprep.subr.mxu0 0.0
    %507 = vmatpush1.msra.mxu0 %v222
    %508 = vmatprep.subr.mxu0 0.0
    %509 = vmatpush1.msra.mxu0 %v221
    %510 = vmatprep.subr.mxu0 0.0
    %511 = vmatpush1.msra.mxu0 %v220
    %512 = vmatprep.subr.mxu0 0.0
    %513 = vmatpush1.msra.mxu0 %v219
    %514 = vmatprep.subr.mxu0 0.0
    %515 = vmatpush1.msra.mxu0 %v218
    %516 = vmatprep.subr.mxu0 0.0
    %517 = vmatpush1.msra.mxu0 %v217
    %518 = vmatprep.subr.mxu0 0.0
    %519 = vmatpush1.msra.mxu0 %v216
    %520 = vmatprep.subr.mxu0 0.0
    %521 = vmatpush1.msra.mxu0 %v215
    %522 = vmatprep.subr.mxu0 0.0
    %523 = vmatpush1.msra.mxu0 %v214
    %524 = vmatprep.subr.mxu0 0.0
    %525 = vmatpush1.msra.mxu0 %v213
    %526 = vmatprep.subr.mxu0 0.0
    %527 = vmatpush1.msra.mxu0 %v212
    %528 = vmatprep.subr.mxu0 0.0
    %529 = vmatpush1.msra.mxu0 %v211
    %530 = vmatprep.subr.mxu0 0.0
    %531 = vmatpush1.msra.mxu0 %v210
    %532 = vmatprep.subr.mxu0 0.0
    %533 = vmatpush1.msra.mxu0 %v209
    %534 = vmatprep.subr.mxu0 0.0
    %535 = vmatpush1.msra.mxu0 %v208
    %536 = vmatprep.subr.mxu0 0.0
    %537 = vmatpush2.msra.mxu0 0.0
    %538 = vmatprep.subr.mxu0 0.0
    %539 = vmatpush2.msra.mxu0 0.0
    %540 = vmatprep.subr.mxu0 0.0
    %541 = vmatpush2.msra.mxu0 0.0
    %542 = vmatprep.subr.mxu0 0.0
    %543 = vmatpush2.msra.mxu0 0.0
    %544 = vmatprep.subr.mxu0 0.0
    %545 = vmatpush2.msra.mxu0 0.0
    %546 = vmatprep.subr.mxu0 0.0
    %547 = vmatpush2.msra.mxu0 0.0
    %548 = vmatprep.subr.mxu0 0.0
    %549 = vmatpush2.msra.mxu0 0.0
    %550 = vmatprep.subr.mxu0 0.0
    %551 = vmatpush2.msra.mxu0 0.0
    %552 = vmatprep.subr.mxu0 0.0
    %553 = vmatpush2.msra.mxu0 0.0
    %554 = vmatprep.subr.mxu0 0.0
    %555 = vmatpush2.msra.mxu0 0.0
    %556 = vmatprep.subr.mxu0 0.0
    %557 = vmatpush2.msra.mxu0 0.0
    %558 = vmatprep.subr.mxu0 0.0
    %559 = vmatpush2.msra.mxu0 0.0
    %560 = vmatprep.subr.mxu0 0.0
    %561 = vmatpush2.msra.mxu0 0.0
    %562 = vmatprep.subr.mxu0 0.0
    %563 = vmatpush2.msra.mxu0 0.0
    %564 = vmatprep.subr.mxu0 0.0
    %565 = vmatpush2.msra.mxu0 0.0
    %566 = vmatprep.subr.mxu0 0.0
    %567 = vmatpush2.msra.mxu0 0.0
    %568 = vmatprep.mubr.f32.mxu0 0.0
    %569 = vmatmul.mubr.f32.gmra.mxu0 %v79
    %v570 = vpop.f32.mrf.mxu0
    %v571 = vadd.f32 %v501, %v570
    %v572 = vpop.f32.mrf.mxu0
    %573 = vdwg.mxu0
    %v574 = vmax.f32 %v571, 0.0
    %v575 = vld [vmem:[#allocation7] sm:$0xff]
    %v576 = vld [vmem:[#allocation7 + $0x8] sm:$0xff]
    %v577 = vld [vmem:[#allocation7 + $0x10] sm:$0xff]
    %v578 = vld [vmem:[#allocation7 + $0x18] sm:$0xff]
    %v579 = vld [vmem:[#allocation7 + $0x20] sm:$0xff]
    %v580 = vld [vmem:[#allocation7 + $0x28] sm:$0xff]
    %v581 = vld [vmem:[#allocation7 + $0x30] sm:$0xff]
    %v582 = vld [vmem:[#allocation7 + $0x38] sm:$0xff]
    %v583 = vld [vmem:[#allocation7 + $0x40] sm:$0xff]
    %v584 = vld [vmem:[#allocation7 + $0x48] sm:$0xff]
    %v585 = vld [vmem:[#allocation7 + $0x50] sm:$0xff]
    %v586 = vld [vmem:[#allocation7 + $0x58] sm:$0xff]
    %v587 = vld [vmem:[#allocation7 + $0x60] sm:$0xff]
    %v588 = vld [vmem:[#allocation7 + $0x68] sm:$0xff]
    %v589 = vld [vmem:[#allocation7 + $0x70] sm:$0xff]
    %v590 = vld [vmem:[#allocation7 + $0x78] sm:$0xff]
    %591 = vmatprep.subr.mxu0 0.0
    %592 = vmatpush1.msra.mxu0 %v590
    %593 = vmatprep.subr.mxu0 0.0
    %594 = vmatpush1.msra.mxu0 %v589
    %595 = vmatprep.subr.mxu0 0.0
    %596 = vmatpush1.msra.mxu0 %v588
    %597 = vmatprep.subr.mxu0 0.0
    %598 = vmatpush1.msra.mxu0 %v587
    %599 = vmatprep.subr.mxu0 0.0
    %600 = vmatpush1.msra.mxu0 %v586
    %601 = vmatprep.subr.mxu0 0.0
    %602 = vmatpush1.msra.mxu0 %v585
    %603 = vmatprep.subr.mxu0 0.0
    %604 = vmatpush1.msra.mxu0 %v584
    %605 = vmatprep.subr.mxu0 0.0
    %606 = vmatpush1.msra.mxu0 %v583
    %607 = vmatprep.subr.mxu0 0.0
    %608 = vmatpush1.msra.mxu0 %v582
    %609 = vmatprep.subr.mxu0 0.0
    %610 = vmatpush1.msra.mxu0 %v581
    %611 = vmatprep.subr.mxu0 0.0
    %612 = vmatpush1.msra.mxu0 %v580
    %613 = vmatprep.subr.mxu0 0.0
    %614 = vmatpush1.msra.mxu0 %v579
    %615 = vmatprep.subr.mxu0 0.0
    %616 = vmatpush1.msra.mxu0 %v578
    %617 = vmatprep.subr.mxu0 0.0
    %618 = vmatpush1.msra.mxu0 %v577
    %619 = vmatprep.subr.mxu0 0.0
    %620 = vmatpush1.msra.mxu0 %v576
    %621 = vmatprep.subr.mxu0 0.0
    %622 = vmatpush1.msra.mxu0 %v575
    %623 = vmatprep.subr.mxu0 0.0
    %624 = vmatpush2.msra.mxu0 0.0
    %625 = vmatprep.subr.mxu0 0.0
    %626 = vmatpush2.msra.mxu0 0.0
    %627 = vmatprep.subr.mxu0 0.0
    %628 = vmatpush2.msra.mxu0 0.0
    %629 = vmatprep.subr.mxu0 0.0
    %630 = vmatpush2.msra.mxu0 0.0
    %631 = vmatprep.subr.mxu0 0.0
    %632 = vmatpush2.msra.mxu0 0.0
    %633 = vmatprep.subr.mxu0 0.0
    %634 = vmatpush2.msra.mxu0 0.0
    %635 = vmatprep.subr.mxu0 0.0
    %636 = vmatpush2.msra.mxu0 0.0
    %637 = vmatprep.subr.mxu0 0.0
    %638 = vmatpush2.msra.mxu0 0.0
    %639 = vmatprep.subr.mxu0 0.0
    %640 = vmatpush2.msra.mxu0 0.0
    %641 = vmatprep.subr.mxu0 0.0
    %642 = vmatpush2.msra.mxu0 0.0
    %643 = vmatprep.subr.mxu0 0.0
    %644 = vmatpush2.msra.mxu0 0.0
    %645 = vmatprep.subr.mxu0 0.0
    %646 = vmatpush2.msra.mxu0 0.0
    %647 = vmatprep.subr.mxu0 0.0
    %648 = vmatpush2.msra.mxu0 0.0
    %649 = vmatprep.subr.mxu0 0.0
    %650 = vmatpush2.msra.mxu0 0.0
    %651 = vmatprep.subr.mxu0 0.0
    %652 = vmatpush2.msra.mxu0 0.0
    %653 = vmatprep.subr.mxu0 0.0
    %654 = vmatpush2.msra.mxu0 0.0
    %655 = vmatprep.mubr.f32.mxu0 0.0
    %656 = vmatmul.mubr.f32.gmra.mxu0 %v574
    %v657 = vpop.f32.mrf.mxu0
    %v658 = vadd.f32 0.0, %v657
    %v659 = vpop.f32.mrf.mxu0
    %660 = vdwg.mxu0
    %v661 = vmax.f32 %v658, 0.0
    %v662 = vld [vmem:[#allocation8] sm:$0xff]
    %v663 = vld [vmem:[#allocation8 + $0x8] sm:$0xff]
    %v664 = vld [vmem:[#allocation8 + $0x10] sm:$0xff]
    %v665 = vld [vmem:[#allocation8 + $0x18] sm:$0xff]
    %v666 = vld [vmem:[#allocation8 + $0x20] sm:$0xff]
    %v667 = vld [vmem:[#allocation8 + $0x28] sm:$0xff]
    %v668 = vld [vmem:[#allocation8 + $0x30] sm:$0xff]
    %v669 = vld [vmem:[#allocation8 + $0x38] sm:$0xff]
    %v670 = vld [vmem:[#allocation8 + $0x40] sm:$0xff]
    %v671 = vld [vmem:[#allocation8 + $0x48] sm:$0xff]
    %v672 = vld [vmem:[#allocation8 + $0x50] sm:$0xff]
    %v673 = vld [vmem:[#allocation8 + $0x58] sm:$0xff]
    %v674 = vld [vmem:[#allocation8 + $0x60] sm:$0xff]
    %v675 = vld [vmem:[#allocation8 + $0x68] sm:$0xff]
    %v676 = vld [vmem:[#allocation8 + $0x70] sm:$0xff]
    %v677 = vld [vmem:[#allocation8 + $0x78] sm:$0xff]
    %678 = vmatprep.subr.mxu0 0.0
    %679 = vmatpush1.msra.mxu0 %v677
    %680 = vmatprep.subr.mxu0 0.0
    %681 = vmatpush1.msra.mxu0 %v676
    %682 = vmatprep.subr.mxu0 0.0
    %683 = vmatpush1.msra.mxu0 %v675
    %684 = vmatprep.subr.mxu0 0.0
    %685 = vmatpush1.msra.mxu0 %v674
    %686 = vmatprep.subr.mxu0 0.0
    %687 = vmatpush1.msra.mxu0 %v673
    %688 = vmatprep.subr.mxu0 0.0
    %689 = vmatpush1.msra.mxu0 %v672
    %690 = vmatprep.subr.mxu0 0.0
    %691 = vmatpush1.msra.mxu0 %v671
    %692 = vmatprep.subr.mxu0 0.0
    %693 = vmatpush1.msra.mxu0 %v670
    %694 = vmatprep.subr.mxu0 0.0
    %695 = vmatpush1.msra.mxu0 %v669
    %696 = vmatprep.subr.mxu0 0.0
    %697 = vmatpush1.msra.mxu0 %v668
    %698 = vmatprep.subr.mxu0 0.0
    %699 = vmatpush1.msra.mxu0 %v667
    %700 = vmatprep.subr.mxu0 0.0
    %701 = vmatpush1.msra.mxu0 %v666
    %702 = vmatprep.subr.mxu0 0.0
    %703 = vmatpush1.msra.mxu0 %v665
    %704 = vmatprep.subr.mxu0 0.0
    %705 = vmatpush1.msra.mxu0 %v664
    %706 = vmatprep.subr.mxu0 0.0
    %707 = vmatpush1.msra.mxu0 %v663
    %708 = vmatprep.subr.mxu0 0.0
    %709 = vmatpush1.msra.mxu0 %v662
    %710 = vmatprep.subr.mxu0 0.0
    %711 = vmatpush2.msra.mxu0 0.0
    %712 = vmatprep.subr.mxu0 0.0
    %713 = vmatpush2.msra.mxu0 0.0
    %714 = vmatprep.subr.mxu0 0.0
    %715 = vmatpush2.msra.mxu0 0.0
    %716 = vmatprep.subr.mxu0 0.0
    %717 = vmatpush2.msra.mxu0 0.0
    %718 = vmatprep.subr.mxu0 0.0
    %719 = vmatpush2.msra.mxu0 0.0
    %720 = vmatprep.subr.mxu0 0.0
    %721 = vmatpush2.msra.mxu0 0.0
    %722 = vmatprep.subr.mxu0 0.0
    %723 = vmatpush2.msra.mxu0 0.0
    %724 = vmatprep.subr.mxu0 0.0
    %725 = vmatpush2.msra.mxu0 0.0
    %726 = vmatprep.subr.mxu0 0.0
    %727 = vmatpush2.msra.mxu0 0.0
    %728 = vmatprep.subr.mxu0 0.0
    %729 = vmatpush2.msra.mxu0 0.0
    %730 = vmatprep.subr.mxu0 0.0
    %731 = vmatpush2.msra.mxu0 0.0
    %732 = vmatprep.subr.mxu0 0.0
    %733 = vmatpush2.msra.mxu0 0.0
    %734 = vmatprep.subr.mxu0 0.0
    %735 = vmatpush2.msra.mxu0 0.0
    %736 = vmatprep.subr.mxu0 0.0
    %737 = vmatpush2.msra.mxu0 0.0
    %738 = vmatprep.subr.mxu0 0.0
    %739 = vmatpush2.msra.mxu0 0.0
    %740 = vmatprep.subr.mxu0 0.0
    %741 = vmatpush2.msra.mxu0 0.0
    %742 = vmatprep.mubr.f32.mxu0 0.0
    %743 = vmatmul.mubr.f32.gmra.mxu0 %v661
    %v744 = vpop.f32.mrf.mxu0
    %v745 = vadd.f32 0.0, %v744
    %v746 = vpop.f32.mrf.mxu0
    %747 = vdwg.mxu0
    %v748 = vlaneseq
    %v749 = vand.u32 %v748, 127
    %vm750 = vcmp.lt.s32.totalorder %v749, 10
    %v751 = vsel %vm750, %v745, -3.4028235e+38
    %752 = vmax.xlane.f32.xlu0 %v751
    %v753 = vpop.xlane.xlu0 %752
    %v754 = vsub.f32 %v751, %v753
    %v755 = vmul.f32 %v754, 1.442695
    %v756 = vpow.pop %v755
    %757 = vadd.xlane.f32.xlu0 %v756
    %v758 = vpop.xlane.xlu0 %757
    %v759 = vlog2.pop %v758
    %v760 = vmul.f32 %v759, 0.6931472
    %v761 = vsub.f32 %v754, %v760
    %762 = vst [vmem:[#allocation10] sm:$0xff] %v761
    // Predicated region
    $region34: #{tpu_custom_call.1} parent=1 // pred_check
      _
    $region35: #{tpu_custom_call.1} parent=1 // pred_check_branch
      %764 = sbr.rel (0) target = $region37
    $region36: #{tpu_custom_call.1} parent=1 // pred_region
      %s766 = ssub.s32 128, 128
      %767 = vsyncadd [#allocation4], %s766
      %s769 = sshll.u32 [#allocation10], 4
      %s770 = int_to_ptr.vmem [resolvable:$true] %s769
      %772 = dma.vmem_to_hbm [thread:$0]  %s770, 128, %s4, [#allocation4]
    $region37: #{tpu_custom_call.1} parent=1 // pred_fallthru
      _
    // Predicated region
    $region38: #{tpu_custom_call.1} parent=1 // pred_check
      _
    $region39: #{tpu_custom_call.1} parent=1 // pred_check_branch
      %774 = sbr.rel (0) target = $region41
    $region40: #{tpu_custom_call.1} parent=1 // pred_region
      %775 = dma.done [#allocation4], 128
    $region41: #{tpu_custom_call.1} parent=1 // pred_fallthru
      _
    %776 = vsyncpa [#allocation3], 1
    %777 = vsyncpa [#allocation6], 1
    %778 = vsyncpa [#allocation9], 1
    %779 = vsyncpa [#allocation4], 1

</llo_original>
